<compile_context>
chip_gen: v7x
topology: tpu7x:2x2x1
jax: 0.10.0
libtpu: 0.0.40
codegen_flags: <defaults>
</compile_context>

<pallas_src>
import functools

import numpy as np
import jax
import jax.numpy as jnp
from jax.experimental import pallas as pl
from jax.experimental.pallas import tpu as pltpu


# ----------------------------------------------------------------------------
# Host-side: PyTorch-exact 1-D bilinear interpolation matrix (align_corners=False)
# ----------------------------------------------------------------------------
def _bilinear_matrix(in_size: int, out_size: int) -> np.ndarray:
    """W of shape (out_size, in_size) s.t. out = W @ in (1-D bilinear, half-pixel)."""
    W = np.zeros((out_size, in_size), dtype=np.float32)
    scale = in_size / out_size
    for i in range(out_size):
        src = (i + 0.5) * scale - 0.5
        if src < 0.0:
            src = 0.0
        i0 = int(np.floor(src))
        if i0 > in_size - 1:
            i0 = in_size - 1
        lam = src - i0
        i1 = i0 + 1 if i0 < in_size - 1 else i0
        W[i, i0] += 1.0 - lam
        W[i, i1] += lam
    return W


def _round_up(x: int, m: int) -> int:
    return ((x + m - 1) // m) * m


# ----------------------------------------------------------------------------
# Generation-aware VMEM policy (128 MiB on v5e/v6e, 64 MiB per TC on v7x)
# ----------------------------------------------------------------------------
def _vmem_policy():
    cap = None
    try:
        info = pltpu.get_tpu_info()
        for name in ("vmem_capacity_bytes", "vmem_size_bytes", "vmem_bytes"):
            v = getattr(info, name, None)
            if v:
                cap = int(v)
                break
    except Exception:
        cap = None
    if cap is None:
        cap = 64 * 1024 * 1024          # conservative fallback: v7x per-TensorCore VMEM
    limit = min(int(cap * 0.70), 100 * 1024 * 1024)   # raise well above default 32 MiB cap
    budget = int(limit * 0.80)          # headroom for Mosaic internal scratch
    return limit, budget


def _pick_tm(M, hw_in, hw_out, in_itemsize, out_itemsize, weight_bytes, budget_bytes,
             target=256):
    """Largest multiple-of-8 row tile <= target whose double-buffered working set fits."""
    def step_bytes(tm):
        return (2 * tm * hw_in * in_itemsize        # x tile (double-buffered)
                + 2 * tm * hw_out * out_itemsize    # pass-2 output tile (double-buffered)
                + 2 * weight_bytes                  # resident interp operator (pipeline bufs)
                + 2 * tm * 4 * 4)                   # stats / per-row affine (tiny)
    tm = min(target, _round_up(M, 8))
    tm = max(8, (tm // 8) * 8)
    while tm > 8 and step_bytes(tm) > budget_bytes:
        tm -= 8
    return tm


# ----------------------------------------------------------------------------
# Kernel 1: interp (one MXU matmul) + ReLU -> per-row (sum, sumsq); y never hits HBM
# ----------------------------------------------------------------------------
def _interp_relu_stats_kernel(x_ref, kt_ref, stats_ref, *, matmul_dtype):
    x = x_ref[...].astype(matmul_dtype)                                 # (TM, HWin)
    y = jnp.dot(x, kt_ref[...], preferred_element_type=jnp.float32)    # (TM, HWout) f32
    y = jnp.maximum(y, 0.0)                                             # ReLU
    stats_ref[:, 0:1] = jnp.sum(y, axis=1, keepdims=True)               # per-row sum
    stats_ref[:, 1:2] = jnp.sum(y * y, axis=1, keepdims=True)           # per-row sumsq


# ----------------------------------------------------------------------------
# Kernel 2: recompute interp + ReLU, apply BN affine, lane-dense final writeback
# ----------------------------------------------------------------------------
def _interp_relu_bn_kernel(x_ref, kt_ref, scale_ref, shift_ref, o_ref, *, matmul_dtype):
    x = x_ref[...].astype(matmul_dtype)                                 # (TM, HWin)
    y = jnp.dot(x, kt_ref[...], preferred_element_type=jnp.float32)    # (TM, HWout) f32
    y = jnp.maximum(y, 0.0)
    o_ref[...] = (y * scale_ref[...] + shift_ref[...]).astype(o_ref.dtype)


# ----------------------------------------------------------------------------
# Wrapper
# ----------------------------------------------------------------------------
def basic_deconv_block(x, upsample_shape, gamma, beta, eps=1e-5,
                       matmul_dtype=jnp.bfloat16, out_dtype=None):
    """x: (N, C, Hin, Win); upsample_shape[2], [3] give Hout, Wout (static)."""
    N, C, Hin, Win = x.shape
    Hout, Wout = int(upsample_shape[2]), int(upsample_shape[3])
    hw_in, hw_out = Hin * Win, Hout * Wout
    out_dtype = x.dtype if out_dtype is None else out_dtype

    # Separable bilinear weights folded into one Kronecker operator -> each grid step
    # is a single lane-dense MXU matmul already in NCHW order.  Built directly in the
    # matmul dtype (bf16 by default) to halve its DMA/VMEM footprint.
    wh = _bilinear_matrix(Hin, Hout)                 # (Hout, Hin)
    ww = _bilinear_matrix(Win, Wout)                 # (Wout, Win)
    kt = jnp.asarray(np.kron(wh, ww).T, dtype=matmul_dtype)   # (hw_in, hw_out)
    weight_bytes = hw_in * hw_out * jnp.dtype(matmul_dtype).itemsize

    # Flatten (N, C) -> M and tile it (up to 256 rows/step) so the MXU sees a real M dim.
    M = N * C
    vmem_limit, budget = _vmem_policy()
    tm = _pick_tm(M, hw_in, hw_out,
                  jnp.dtype(x.dtype).itemsize, jnp.dtype(out_dtype).itemsize,
                  weight_bytes, budget, target=256)
    Mp = _round_up(M, tm)
    gm = Mp // tm
    # NOTE(v7x): with gm >= 2 the single "parallel" axis is shared across both
    # TensorCores; at tiny shapes (gm == 1) there is nothing to balance.

    x2 = x.reshape(M, hw_in)                          # native dtype, metadata-only reshape
    if Mp != M:
        # Zero rows: interp+ReLU of zero is zero; excluded from stats/output below.
        x2 = jnp.pad(x2, ((0, Mp - M), (0, 0)))

    cparams = pltpu.CompilerParams(
        dimension_semantics=("parallel",),
        vmem_limit_bytes=vmem_limit,
    )

    # ---- Pass 1: interp + ReLU + per-row partial statistics (no |y| writeback) -------
    stats = pl.pallas_call(
        functools.partial(_interp_relu_stats_kernel, matmul_dtype=matmul_dtype),
        out_shape=jax.ShapeDtypeStruct((Mp, 2), jnp.float32),
        grid_spec=pltpu.PrefetchScalarGridSpec(
            num_scalar_prefetch=0,
            grid=(gm,),
            in_specs=[
                pl.BlockSpec((tm, hw_in), lambda i: (i, 0)),
                pl.BlockSpec((hw_in, hw_out), lambda i: (0, 0)),   # resident operator
            ],
            out_specs=pl.BlockSpec((tm, 2), lambda i: (i, 0)),
        ),
        compiler_params=cparams,
    )(x2, kt)

    # ---- Tiny per-channel glue (C-sized vectors; negligible next to the kernels) -----
    count = N * hw_out
    stats_nc = stats[:M].reshape(N, C, 2)
    mean = jnp.sum(stats_nc[..., 0], axis=0) / count                     # (C,)
    mean_sq = jnp.sum(stats_nc[..., 1], axis=0) / count                  # (C,)
    var = jnp.maximum(mean_sq - mean * mean, 0.0)                        # biased var (train norm)
    scale = gamma.astype(jnp.float32) * jax.lax.rsqrt(var + eps)         # (C,)
    shift = beta.astype(jnp.float32) - mean * scale                      # (C,)
    # Per-row affine: row m = n*C + c  ->  scale[c].  Padded rows get zeros (unused).
    scale_rows = jnp.pad(jnp.tile(scale, N), (0, Mp - M)).reshape(Mp, 1)
    shift_rows = jnp.pad(jnp.tile(shift, N), (0, Mp - M)).reshape(Mp, 1)

    # ---- Pass 2: recompute interp + ReLU, apply BN affine, write final output --------
    out2 = pl.pallas_call(
        functools.partial(_interp_relu_bn_kernel, matmul_dtype=matmul_dtype),
        out_shape=jax.ShapeDtypeStruct((Mp, hw_out), out_dtype),
        grid_spec=pltpu.PrefetchScalarGridSpec(
            num_scalar_prefetch=0,
            grid=(gm,),
            in_specs=[
                pl.BlockSpec((tm, hw_in), lambda i: (i, 0)),
                pl.BlockSpec((hw_in, hw_out), lambda i: (0, 0)),
                pl.BlockSpec((tm, 1), lambda i: (i, 0)),
                pl.BlockSpec((tm, 1), lambda i: (i, 0)),
            ],
            out_specs=pl.BlockSpec((tm, hw_out), lambda i: (i, 0)),
        ),
        compiler_params=cparams,
    )(x2, kt, scale_rows, shift_rows)

    # Drop padded rows and restore NCHW (contiguous reshape).
    return out2[:M].reshape(N, C, Hout, Wout)


# ----------------------------------------------------------------------------
# Pure-JAX reference (separable formulation) for correctness checks
# ----------------------------------------------------------------------------
def _reference(x, upsample_shape, gamma, beta, eps=1e-5):
    N, C, Hin, Win = x.shape
    Hout, Wout = int(upsample_shape[2]), int(upsample_shape[3])
    wh = jnp.asarray(_bilinear_matrix(Hin, Hout))
    wwt = jnp.asarray(_bilinear_matrix(Win, Wout).T)
    y = jnp.einsum('ab,ncbw,wd->ncad', wh, x.astype(jnp.float32), wwt)
    y = jnp.maximum(y, 0.0)
    mean = jnp.mean(y, axis=(0, 2, 3))
    var = jnp.mean(y * y, axis=(0, 2, 3)) - mean * mean
    yn = (y - mean[None, :, None, None]) / jnp.sqrt(var + eps)[None, :, None, None]
    return yn * gamma[None, :, None, None] + beta[None, :, None, None]


if __name__ == "__main__":
    key = jax.random.PRNGKey(0)
    k1, k2, k3 = jax.random.split(key, 3)

    # Small shape matching the module's usage (channel-estimator maps).
    N, C, Hin, Win = 2, 4, 8, 8
    upsample_shape = (N, C, 16, 16)

    x = jax.random.normal(k1, (N, C, Hin, Win), dtype=jnp.float32)
    gamma = 0.5 + jax.random.uniform(k2, (C,), dtype=jnp.float32)
    beta = 0.1 * jax.random.normal(k3, (C,), dtype=jnp.float32)
    ref = _reference(x, upsample_shape, gamma, beta)

    # Default path: bf16 MXU matmul (native on v5e/v6e/v7x), f32 accumulate.
    out = jax.block_until_ready(basic_deconv_block(x, upsample_shape, gamma, beta))
    assert out.shape == (N, C, 16, 16)
    assert jnp.allclose(out, ref, atol=1e-1, rtol=1e-1)

    # Exact-parity path: f32 matmul, tight tolerance.
    out_f32 = jax.block_until_ready(
        basic_deconv_block(x, upsample_shape, gamma, beta, matmul_dtype=jnp.float32))
    assert jnp.allclose(out_f32, ref, atol=1e-4, rtol=1e-4)

    # Larger flattened-M config: exercises the 256-row M tiling, multi-step grid and
    # zero-row padding (M = 384 -> TM = 256, Mp = 512, 2 grid steps).
    N2, C2 = 4, 96
    xb = jax.random.normal(k1, (N2, C2, Hin, Win), dtype=jnp.float32)
    gb = 0.5 + jax.random.uniform(k2, (C2,), dtype=jnp.float32)
    bb = 0.1 * jax.random.normal(k3, (C2,), dtype=jnp.float32)
    refb = _reference(xb, (N2, C2, 16, 16), gb, bb)
    outb = jax.block_until_ready(
        basic_deconv_block(xb, (N2, C2, 16, 16), gb, bb, matmul_dtype=jnp.float32))
    assert outb.shape == (N2, C2, 16, 16)
    assert jnp.allclose(outb, refb, atol=1e-4, rtol=1e-4)

    print("KERNEL_OK")
</pallas_src>

<mosaic_0001>
module attributes {stable_mosaic.version = 11 : i64} {
  func.func @_interp_relu_stats_kernel(%arg0: i32, %arg1: memref<8x64xf32, #tpu.memory_space<vmem>>, %arg2: memref<64x256xbf16, #tpu.memory_space<vmem>>, %arg3: memref<8x2xf32, #tpu.memory_space<vmem>>) attributes {dimension_semantics = [#tpu.dimension_semantics<parallel>], iteration_bounds = array<i64: 1>, scalar_prefetch = 0 : i64, scratch_operands = 0 : i64, tpu.core_type = #tpu.core_type<tc>, window_params = [{transform_indices = @transform_0, window_bounds = array<i64: 8, 64>}, {pipeline_mode = #tpu.pipeline_mode<synchronous>, transform_indices = @transform_1, window_bounds = array<i64: 64, 256>}, {transform_indices = @transform_2, window_bounds = array<i64: 8, 2>}]} {
    %c0 = arith.constant 0 : index
    %c0_0 = arith.constant 0 : index
    %0 = vector.load %arg1[%c0, %c0_0] : memref<8x64xf32, #tpu.memory_space<vmem>>, vector<8x64xf32>
    %1 = arith.truncf %0 : vector<8x64xf32> to vector<8x64xbf16>
    %c0_1 = arith.constant 0 : index
    %c0_2 = arith.constant 0 : index
    %2 = vector.load %arg2[%c0_1, %c0_2] : memref<64x256xbf16, #tpu.memory_space<vmem>>, vector<64x256xbf16>
    %cst = arith.constant dense<0.000000e+00> : vector<8x256xf32>
    %3 = tpu.matmul %1, %2, %cst {dimension_numbers = #tpu.dot_dimension_numbers<[1], [0], [0], [1], [0, 0, 1, 1], [], []>} : vector<8x64xbf16>, vector<64x256xbf16>, vector<8x256xf32> -> vector<8x256xf32>
    %cst_3 = arith.constant 0.000000e+00 : f32
    %4 = vector.broadcast %cst_3 : f32 to vector<8x256xf32>
    %5 = arith.maximumf %3, %4 : vector<8x256xf32>
    %cst_4 = arith.constant dense<0.000000e+00> : vector<8xf32>
    %6 = vector.multi_reduction <add>, %5, %cst_4 [1] : vector<8x256xf32> to vector<8xf32>
    %7 = vector.shape_cast %6 : vector<8xf32> to vector<8x1xf32>
    %c0_5 = arith.constant 0 : index
    %c0_6 = arith.constant 0 : index
    %8 = vector.load %arg3[%c0_5, %c0_6] : memref<8x2xf32, #tpu.memory_space<vmem>>, vector<8x1xf32>
    tpu.vector_store %arg3[%c0_5, %c0_6], %7 {strides = array<i32>} : memref<8x2xf32, #tpu.memory_space<vmem>>, vector<8x1xf32>,
    %9 = arith.mulf %5, %5 : vector<8x256xf32>
    %cst_7 = arith.constant dense<0.000000e+00> : vector<8xf32>
    %10 = vector.multi_reduction <add>, %9, %cst_7 [1] : vector<8x256xf32> to vector<8xf32>
    %11 = vector.shape_cast %10 : vector<8xf32> to vector<8x1xf32>
    %c0_8 = arith.constant 0 : index
    %c1 = arith.constant 1 : index
    %12 = vector.load %arg3[%c0_8, %c1] : memref<8x2xf32, #tpu.memory_space<vmem>>, vector<8x1xf32>
    tpu.vector_store %arg3[%c0_8, %c1], %11 {strides = array<i32>} : memref<8x2xf32, #tpu.memory_space<vmem>>, vector<8x1xf32>,
    return
  }
  func.func @transform_0(%arg0: i32) -> (i32, i32) {
    %c0_i32 = arith.constant 0 : i32
    %c0_i32_0 = arith.constant 0 : i32
    return %arg0, %c0_i32 : i32, i32
  }
  func.func @transform_1(%arg0: i32) -> (i32, i32) {
    %c0_i32 = arith.constant 0 : i32
    %c0_i32_0 = arith.constant 0 : i32
    %c0_i32_1 = arith.constant 0 : i32
    return %c0_i32, %c0_i32_0 : i32, i32
  }
  func.func @transform_2(%arg0: i32) -> (i32, i32) {
    %c0_i32 = arith.constant 0 : i32
    %c0_i32_0 = arith.constant 0 : i32
    return %arg0, %c0_i32 : i32, i32
  }
}

</mosaic_0001>

<llo_original>
// kernel: tpu_custom_call.1
$region0: #{tpu_custom_call.1}
  #allocation0 [shape = 'u32[]', space=smem, size = 0x4, offset = 0x4, fixed_abs, tag = 'smem constant byte address 0x4 - core index']
  #allocation1 [shape = 'u32[144,128]{1,0:T(1,128)}', space=vmem, size = 0x12000, scoped, tag = 'internal scratch']
  %s0 = inlined_call_operand.hbm [shape: f32[8,64], index: 0, kind: input, shape index: {}]
  %s1 = inlined_call_operand.hbm [shape: bf16[64,256], index: 1, kind: input, shape index: {}]
  %s2 = inlined_call_operand.vmem [shape: f32[8,2], index: 2, kind: output, shape index: {}]
  %s3 = sld [smem:[#allocation0]]
  $region26: #{tpu_custom_call.1} parent=0
    _
  %s5 = ssub.s32 1, %s3
  %s6 = scalar_select 0, %s5, %s3
  $region1: #{tpu_custom_call.1} parent=0
    #allocation2 [shape = 'u8[4096]{0}', space=vmem, size = 0x1000, scoped, tag = 'input window, operand 0, single buffered']
    #allocation3 [shape = 's32[1]{0}', space=sflag, size = 0x4, scoped, tag = 'scoped memory for tpu_custom_call.1']
    #allocation4 [shape = 'u8[32768]{0}', space=vmem, size = 0x8000, scoped, tag = 'input window, operand 1, single buffered']
    #allocation5 [shape = 's32[1]{0}', space=sflag, size = 0x4, scoped, tag = 'scoped memory for tpu_custom_call.1']
    %7 = vsyncpa [#allocation3], 0
    %8 = vsyncpa [#allocation5], 0
    // Predicated region
    $region2: #{tpu_custom_call.1} parent=1 // pred_check
      _
    $region3: #{tpu_custom_call.1} parent=1 // pred_check_branch
      %10 = sbr.rel (0) target = $region5
    $region4: #{tpu_custom_call.1} parent=1 // pred_region
      %s12 = ssub.s32 128, 128
      %13 = vsyncadd [#allocation3], %s12
      %s15 = sshll.u32 [#allocation2], 4
      %s16 = int_to_ptr.vmem [resolvable:$true] %s15
      %18 = dma.hbm_to_vmem [thread:$0]  %s0, 128, %s16, [#allocation3]
    $region5: #{tpu_custom_call.1} parent=1 // pred_fallthru
      _
    // Predicated region
    $region6: #{tpu_custom_call.1} parent=1 // pred_check
      _
    $region7: #{tpu_custom_call.1} parent=1 // pred_check_branch
      %20 = sbr.rel (0) target = $region9
    $region8: #{tpu_custom_call.1} parent=1 // pred_region
      %s22 = ssub.s32 1024, 1024
      %23 = vsyncadd [#allocation5], %s22
      %s24 = sshll.u32 [#allocation4], 4
      %s25 = int_to_ptr.vmem [resolvable:$true] %s24
      %30 = dma.hbm_to_vmem [thread:$0]  %s1, 1024, %s25, [#allocation5], 128, 128, 8
    $region9: #{tpu_custom_call.1} parent=1 // pred_fallthru
      _
    // Predicated region
    $region10: #{tpu_custom_call.1} parent=1 // pred_check
      _
    $region11: #{tpu_custom_call.1} parent=1 // pred_check_branch
      %32 = sbr.rel (0) target = $region13
    $region12: #{tpu_custom_call.1} parent=1 // pred_region
      %33 = dma.done [#allocation3], 128
    $region13: #{tpu_custom_call.1} parent=1 // pred_fallthru
      _
    // Predicated region
    $region14: #{tpu_custom_call.1} parent=1 // pred_check
      _
    $region15: #{tpu_custom_call.1} parent=1 // pred_check_branch
      %35 = sbr.rel (0) target = $region17
    $region16: #{tpu_custom_call.1} parent=1 // pred_region
      %36 = dma.done [#allocation5], 1024
    $region17: #{tpu_custom_call.1} parent=1 // pred_fallthru
      _
    %v38 = vld [vmem:[#allocation2] sm:$0xff]
    %v39 = vpack.c.bf16 %v38, %v38
    %v40 = vld [vmem:[#allocation4] sm:$0xff]
    %v41 = vld [vmem:[#allocation4 + $0x8] sm:$0xff]
    %v42 = vld [vmem:[#allocation4 + $0x10] sm:$0xff]
    %v43 = vld [vmem:[#allocation4 + $0x18] sm:$0xff]
    %v44 = vld [vmem:[#allocation4 + $0x20] sm:$0xff]
    %v45 = vld [vmem:[#allocation4 + $0x28] sm:$0xff]
    %v46 = vld [vmem:[#allocation4 + $0x30] sm:$0xff]
    %v47 = vld [vmem:[#allocation4 + $0x38] sm:$0xff]
    %v56 = vunpack.c.l.b16 %v40
    %v57 = vunpack.c.h.b16 %v40
    %v58 = vunpack.c.l.b16 %v41
    %v59 = vunpack.c.h.b16 %v41
    %v60 = vunpack.c.l.b16 %v42
    %v61 = vunpack.c.h.b16 %v42
    %v62 = vunpack.c.l.b16 %v43
    %v63 = vunpack.c.h.b16 %v43
    %v64 = vunpack.c.l.b16 %v44
    %v65 = vunpack.c.h.b16 %v44
    %v66 = vunpack.c.l.b16 %v45
    %v67 = vunpack.c.h.b16 %v45
    %v68 = vunpack.c.l.b16 %v46
    %v69 = vunpack.c.h.b16 %v46
    %v70 = vunpack.c.l.b16 %v47
    %v71 = vunpack.c.h.b16 %v47
    %v72 = vpack.c.b16 %v58, %v56
    %v73 = vpack.c.b16 %v59, %v57
    %v74 = vpack.c.b16 %v62, %v60
    %v75 = vpack.c.b16 %v63, %v61
    %v76 = vpack.c.b16 %v66, %v64
    %v77 = vpack.c.b16 %v67, %v65
    %v78 = vpack.c.b16 %v70, %v68
    %v79 = vpack.c.b16 %v71, %v69
    %vm88 = vcmask 523264
    %v90 = vsel %vm88, %v39, 0
    %92 = vmatprep.subr.bf16.mxu0 %v73
    %93 = vmatpush1.bf16.msra.mxu0 %v72
    %94 = vmatprep.subr.bf16.mxu0 %v75
    %95 = vmatpush1.bf16.msra.mxu0 %v74
    %96 = vmatprep.subr.bf16.mxu0 %v77
    %97 = vmatpush1.bf16.msra.mxu0 %v76
    %98 = vmatprep.subr.bf16.mxu0 %v79
    %99 = vmatpush1.bf16.msra.mxu0 %v78
    %100 = vmatprep.subr.bf16.mxu0 0
    %101 = vmatpush1.bf16.msra.mxu0 0
    %102 = vmatprep.subr.bf16.mxu0 0
    %103 = vmatpush1.bf16.msra.mxu0 0
    %104 = vmatprep.subr.bf16.mxu0 0
    %105 = vmatpush1.bf16.msra.mxu0 0
    %106 = vmatprep.subr.bf16.mxu0 0
    %107 = vmatpush1.bf16.msra.mxu0 0
    %108 = vmatprep.subr.bf16.mxu0 0
    %109 = vmatpush1.bf16.msra.mxu0 0
    %110 = vmatprep.subr.bf16.mxu0 0
    %111 = vmatpush1.bf16.msra.mxu0 0
    %112 = vmatprep.subr.bf16.mxu0 0
    %113 = vmatpush1.bf16.msra.mxu0 0
    %114 = vmatprep.subr.bf16.mxu0 0
    %115 = vmatpush1.bf16.msra.mxu0 0
    %116 = vmatprep.subr.bf16.mxu0 0
    %117 = vmatpush1.bf16.msra.mxu0 0
    %118 = vmatprep.subr.bf16.mxu0 0
    %119 = vmatpush1.bf16.msra.mxu0 0
    %120 = vmatprep.subr.bf16.mxu0 0
    %121 = vmatpush1.bf16.msra.mxu0 0
    %122 = vmatprep.subr.bf16.mxu0 0
    %123 = vmatpush1.bf16.msra.mxu0 0
    %124 = vmatprep.mubr.bf16.mxu0 0
    %125 = vmatmul.mubr.bf16.gmra.mrb[0].mxu0 %v90
    %v126 = vpop.f32.mrb[0].mxu0
    %v127 = vadd.f32 0.0, %v126
    %v128 = vpop.f32.mrb[0].mxu0
    %v129 = vadd.f32 0.0, %v128
    %v130 = vpop.f32.mrb[0].mxu0
    %v131 = vpop.f32.mrb[0].mxu0
    %132 = vdwg.mxu0
    %v133 = vmax.f32 %v127, 0.0
    %v134 = vmax.f32 %v129, 0.0
    %v135 = vadd.f32 %v133, %v134
    %136 = vadd.xlane.f32.xlu0 %v135
    %v137 = vpop.xlane.xlu0 %136
    %vm138 = vcmask 7168
    %139 = vst.msk [vmem:[%s2] sm:$0xff] %vm138, %v137
    %v140 = vmul.f32 %v133, %v133
    %v141 = vmul.f32 %v134, %v134
    %v142 = vadd.f32 %v140, %v141
    %143 = vadd.xlane.f32.xlu0 %v142
    %v144 = vpop.xlane.xlu0 %143
    %vm145 = vcmask 15368
    %146 = vst.msk [vmem:[%s2] sm:$0xff] %vm145, %v144
    // Predicated region
    $region18: #{tpu_custom_call.1} parent=1 // pred_check
      _
    $region19: #{tpu_custom_call.1} parent=1 // pred_check_branch
      %148 = sbr.rel (0) target = $region21
    $region20: #{tpu_custom_call.1} parent=1 // pred_region
      _
    $region21: #{tpu_custom_call.1} parent=1 // pred_fallthru
      _
    // Predicated region
    $region22: #{tpu_custom_call.1} parent=1 // pred_check
      _
    $region23: #{tpu_custom_call.1} parent=1 // pred_check_branch
      %150 = sbr.rel (0) target = $region25
    $region24: #{tpu_custom_call.1} parent=1 // pred_region
      _
    $region25: #{tpu_custom_call.1} parent=1 // pred_fallthru
      _
    %151 = vsyncpa [#allocation3], 1
    %152 = vsyncpa [#allocation5], 1

</llo_original>
